<compile_context>
chip_gen: v7x
topology: tpu7x:2x2x1
jax: 0.10.0
libtpu: 0.0.40
codegen_flags: <defaults>
</compile_context>

<pallas_src>
from enum import Enum
from functools import partial

import jax
import jax.numpy as jnp
from jax.experimental import pallas as pl
from jax.experimental.pallas import tpu as pltpu


class FendaJoinMode(Enum):
    CONCATENATE = "CONCATENATE"
    SUM = "SUM"


# ----------------------------- Pallas kernels ------------------------------ #

def _fenda_concat_kernel_nok(local_ref, global_ref, wl_ref, wg_ref, b_ref, o_ref):
    # Fast path (whole K in one tile): out = local@Wl + global@Wg + b, no scratch.
    acc = jnp.dot(local_ref[...], wl_ref[...], preferred_element_type=jnp.float32)
    acc = acc + jnp.dot(global_ref[...], wg_ref[...],
                        preferred_element_type=jnp.float32)
    o_ref[...] = (acc + b_ref[...].astype(jnp.float32)).astype(o_ref.dtype)


def _fenda_sum_kernel_nok(local_ref, global_ref, w_ref, b_ref, o_ref):
    # Fast path: out = (local + global) @ W + b, add folded into the kernel.
    joined = local_ref[...] + global_ref[...]
    acc = jnp.dot(joined, w_ref[...], preferred_element_type=jnp.float32)
    o_ref[...] = (acc + b_ref[...].astype(jnp.float32)).astype(o_ref.dtype)


def _fenda_concat_kernel(local_ref, global_ref, wl_ref, wg_ref, b_ref,
                         o_ref, acc_ref):
    # K-loop path: out = concat([local, global]) @ W + b
    #            = local @ W[:D] + global @ W[D:] + b (concat distributed).
    k = pl.program_id(2)

    @pl.when(k == 0)
    def _():
        # Fold the bias into the accumulator init (no extra VPU pass at the end).
        acc_ref[...] = jnp.broadcast_to(b_ref[...].astype(jnp.float32),
                                        acc_ref.shape)

    # Single fused accumulator update: one (tm, tn) VMEM RMW per K step.
    acc_ref[...] += (
        jnp.dot(local_ref[...], wl_ref[...], preferred_element_type=jnp.float32)
        + jnp.dot(global_ref[...], wg_ref[...], preferred_element_type=jnp.float32)
    )

    @pl.when(k == pl.num_programs(2) - 1)
    def _():
        o_ref[...] = acc_ref[...].astype(o_ref.dtype)


def _fenda_sum_kernel(local_ref, global_ref, w_ref, b_ref, o_ref, acc_ref):
    # K-loop path: out = (local + global) @ W + b, add folded into the K loop
    # (VPU work hidden under MXU/DMA slots; no (B, D) intermediate in HBM).
    k = pl.program_id(2)

    @pl.when(k == 0)
    def _():
        acc_ref[...] = jnp.broadcast_to(b_ref[...].astype(jnp.float32),
                                        acc_ref.shape)

    joined = local_ref[...] + global_ref[...]
    acc_ref[...] += jnp.dot(joined, w_ref[...],
                            preferred_element_type=jnp.float32)

    @pl.when(k == pl.num_programs(2) - 1)
    def _():
        o_ref[...] = acc_ref[...].astype(o_ref.dtype)


# ----------------------------- Tiling helpers ------------------------------ #

def _round_up(x, m):
    return ((x + m - 1) // m) * m


def _pad2(x, rows, cols):
    r, c = x.shape
    if r == rows and c == cols:
        return x
    return jnp.pad(x, ((0, rows - r), (0, cols - c)))


def _sublane_multiple(dtype):
    # f32 -> 8, bf16 -> 16, int8/fp8 -> 32 (sub-32-bit packs along sublanes).
    return max(8, 32 // jnp.dtype(dtype).itemsize)


def _largest_tile(padded_dim, unit, cap, min_blocks=1):
    """Largest tile = unit*d with d | (padded_dim // unit), tile <= cap and
    padded_dim // tile >= min_blocks. Falls back to `unit` if nothing fits."""
    m = padded_dim // unit
    best = unit
    for d in range(1, m + 1):
        if m % d == 0:
            tile = unit * d
            if tile <= cap and (padded_dim // tile) >= min_blocks:
                best = tile
    return best


_VMEM_CAPACITY_CACHE = []


def _vmem_capacity_bytes():
    if not _VMEM_CAPACITY_CACHE:
        try:
            cap = int(pltpu.get_tpu_info().vmem_capacity_bytes)
        except Exception:
            cap = 64 * 1024 * 1024  # conservative (v7x-sized) fallback
        _VMEM_CAPACITY_CACHE.append(cap)
    return _VMEM_CAPACITY_CACHE[0]


def _tile_caps():
    vmem = _vmem_capacity_bytes()
    if vmem >= 100 * 1024 * 1024:
        # v5e / v6e: 128 MiB physical VMEM -> larger tiles, higher scoped limit.
        return dict(tm_max=512, tn_max=2048, tk_max=1024,
                    vmem_limit=96 * 1024 * 1024)
    # v7x: 64 MiB physical VMEM per TensorCore -> tighter caps.
    return dict(tm_max=256, tn_max=1024, tk_max=1024,
                vmem_limit=48 * 1024 * 1024)


# ------------------------------ Weight prep --------------------------------- #

def prepare_fenda_head(w, b, mode: FendaJoinMode):
    """Once-per-module weight prep (hoisted out of the jitted forward): split
    the concat weight into its local/global halves and zero-pad everything to
    128-multiples. Returns (w_parts, bias_padded, out_features)."""
    w = jnp.asarray(w)
    b = jnp.asarray(b).reshape(1, -1)
    if mode == FendaJoinMode.CONCATENATE:
        two_d, H = w.shape
        D = two_d // 2
        Dp, Hp = _round_up(D, 128), _round_up(H, 128)
        w_parts = (_pad2(w[:D], Dp, Hp), _pad2(w[D:], Dp, Hp))
    else:
        D, H = w.shape
        Dp, Hp = _round_up(D, 128), _round_up(H, 128)
        w_parts = (_pad2(w, Dp, Hp),)
    bias_p = _pad2(b, 1, Hp)
    return w_parts, bias_p, H


# ------------------------------- Forward ------------------------------------ #

@partial(jax.jit, static_argnames=("mode", "out_features",
                                   "tm_max", "tn_max", "tk_max"))
def fenda_head_forward(local_tensor, global_tensor, w_parts, bias_p, *,
                       mode: FendaJoinMode, out_features,
                       tm_max=None, tn_max=None, tk_max=None):
    """Pallas FendaHeadModule.forward (linear head).

    local_tensor, global_tensor: (B, D)
    w_parts: pre-padded weight halves from prepare_fenda_head
    bias_p:  pre-padded (1, Hp) bias
    Returns (B, out_features) in local_tensor.dtype.
    """
    caps = _tile_caps()
    tm_max = tm_max or caps["tm_max"]
    tn_max = tn_max or caps["tn_max"]
    tk_max = tk_max or caps["tk_max"]
    vmem_limit = caps["vmem_limit"]

    B, D = local_tensor.shape
    Dp, Hp = w_parts[0].shape
    H = out_features

    # Dtype-aware sublane rounding for the batch tile.
    sub = _sublane_multiple(local_tensor.dtype)
    tm = min(_round_up(B, sub), tm_max)
    Bp = _round_up(B, tm)
    m_blocks = Bp // tm

    tk = _largest_tile(Dp, 128, tk_max)
    # If M can't shard across v7x's two cores, make sure N has >= 2 blocks.
    min_n_blocks = 2 if (m_blocks == 1 and Hp >= 256) else 1
    tn = _largest_tile(Hp, 128, tn_max, min_blocks=min_n_blocks)

    k_blocks = Dp // tk
    n_blocks = Hp // tn

    lt = _pad2(local_tensor, Bp, Dp)
    gt = _pad2(global_tensor, Bp, Dp)

    out_shape = jax.ShapeDtypeStruct((Bp, Hp), local_tensor.dtype)
    is_concat = (mode == FendaJoinMode.CONCATENATE)

    if k_blocks == 1:
        # Fast path: whole K in one tile -> no reduction axis, no scratch.
        grid = (m_blocks, n_blocks)
        act_spec = pl.BlockSpec((tm, Dp), lambda i, j: (i, 0))
        w_spec = pl.BlockSpec((Dp, tn), lambda i, j: (0, j))
        b_spec = pl.BlockSpec((1, tn), lambda i, j: (0, j))
        out_spec = pl.BlockSpec((tm, tn), lambda i, j: (i, j))
        cp = pltpu.CompilerParams(
            dimension_semantics=("parallel", "parallel"),
            vmem_limit_bytes=vmem_limit)
        if is_concat:
            out = pl.pallas_call(
                _fenda_concat_kernel_nok, grid=grid,
                in_specs=[act_spec, act_spec, w_spec, w_spec, b_spec],
                out_specs=out_spec, out_shape=out_shape,
                compiler_params=cp,
            )(lt, gt, w_parts[0], w_parts[1], bias_p)
        else:
            out = pl.pallas_call(
                _fenda_sum_kernel_nok, grid=grid,
                in_specs=[act_spec, act_spec, w_spec, b_spec],
                out_specs=out_spec, out_shape=out_shape,
                compiler_params=cp,
            )(lt, gt, w_parts[0], bias_p)
    else:
        grid = (m_blocks, n_blocks, k_blocks)
        act_spec = pl.BlockSpec((tm, tk), lambda i, j, k: (i, k))
        w_spec = pl.BlockSpec((tk, tn), lambda i, j, k: (k, j))
        b_spec = pl.BlockSpec((1, tn), lambda i, j, k: (0, j))
        out_spec = pl.BlockSpec((tm, tn), lambda i, j, k: (i, j))
        cp = pltpu.CompilerParams(
            dimension_semantics=("parallel", "parallel", "arbitrary"),
            vmem_limit_bytes=vmem_limit)
        scratch = [pltpu.VMEM((tm, tn), jnp.float32)]
        if is_concat:
            out = pl.pallas_call(
                _fenda_concat_kernel, grid=grid,
                in_specs=[act_spec, act_spec, w_spec, w_spec, b_spec],
                out_specs=out_spec, out_shape=out_shape,
                scratch_shapes=scratch, compiler_params=cp,
            )(lt, gt, w_parts[0], w_parts[1], bias_p)
        else:
            out = pl.pallas_call(
                _fenda_sum_kernel, grid=grid,
                in_specs=[act_spec, act_spec, w_spec, b_spec],
                out_specs=out_spec, out_shape=out_shape,
                scratch_shapes=scratch, compiler_params=cp,
            )(lt, gt, w_parts[0], bias_p)

    return out[:B, :H]


def fenda_head_apply(local_tensor, global_tensor, w, b, mode: FendaJoinMode,
                     **tile_overrides):
    """Convenience: module-style API (prep + forward)."""
    w_parts, bias_p, H = prepare_fenda_head(w, b, mode)
    return fenda_head_forward(local_tensor, global_tensor, w_parts, bias_p,
                              mode=mode, out_features=H, **tile_overrides)


# ------------------------------ Reference ----------------------------------- #

def fenda_head_forward_ref(local_tensor, global_tensor, w, b,
                           mode: FendaJoinMode):
    if mode == FendaJoinMode.CONCATENATE:
        head_input = jnp.concatenate([local_tensor, global_tensor], axis=-1)
    else:
        head_input = local_tensor + global_tensor
    out = jnp.dot(head_input, w, preferred_element_type=jnp.float32)
    return (out + b.reshape(1, -1).astype(jnp.float32)).astype(local_tensor.dtype)


# --------------------------------- Main ------------------------------------- #

if __name__ == "__main__":
    key = jax.random.PRNGKey(0)

    # Case 1: aligned shapes. Default caps hit the fast (no-K) path and the
    # >=2-N-blocks heuristic; the tk_max=128 run exercises the K-loop path.
    B, D, H = 8, 384, 256
    k_l, k_g, k_wc, k_ws, k_b = jax.random.split(key, 5)
    local_t = jax.random.normal(k_l, (B, D), dtype=jnp.float32)
    global_t = jax.random.normal(k_g, (B, D), dtype=jnp.float32)
    w_cat = jax.random.normal(k_wc, (2 * D, H), dtype=jnp.float32) * 0.02
    w_sum = jax.random.normal(k_ws, (D, H), dtype=jnp.float32) * 0.02
    bias = jax.random.normal(k_b, (1, H), dtype=jnp.float32) * 0.01

    ref_cat = fenda_head_forward_ref(local_t, global_t, w_cat, bias,
                                     FendaJoinMode.CONCATENATE)
    ref_sum = fenda_head_forward_ref(local_t, global_t, w_sum, bias,
                                     FendaJoinMode.SUM)

    # Fast path (default caps).
    out_cat = jax.block_until_ready(
        fenda_head_apply(local_t, global_t, w_cat, bias,
                         FendaJoinMode.CONCATENATE))
    assert out_cat.shape == (B, H)
    assert jnp.allclose(out_cat, ref_cat, atol=1e-3, rtol=1e-3)

    out_sum = jax.block_until_ready(
        fenda_head_apply(local_t, global_t, w_sum, bias, FendaJoinMode.SUM))
    assert out_sum.shape == (B, H)
    assert jnp.allclose(out_sum, ref_sum, atol=1e-3, rtol=1e-3)

    # K-loop path (forced small tiles: grid = (1, 2, 3)).
    out_cat_k = jax.block_until_ready(
        fenda_head_apply(local_t, global_t, w_cat, bias,
                         FendaJoinMode.CONCATENATE, tn_max=128, tk_max=128))
    assert jnp.allclose(out_cat_k, ref_cat, atol=1e-3, rtol=1e-3)

    out_sum_k = jax.block_until_ready(
        fenda_head_apply(local_t, global_t, w_sum, bias, FendaJoinMode.SUM,
                         tn_max=128, tk_max=128))
    assert jnp.allclose(out_sum_k, ref_sum, atol=1e-3, rtol=1e-3)

    # Case 2: unaligned shapes (exercises wrapper-side zero padding).
    B2, D2, H2 = 5, 200, 100
    k_l2, k_g2, k_w2, k_b2 = jax.random.split(jax.random.PRNGKey(1), 4)
    local2 = jax.random.normal(k_l2, (B2, D2), dtype=jnp.float32)
    global2 = jax.random.normal(k_g2, (B2, D2), dtype=jnp.float32)
    w_cat2 = jax.random.normal(k_w2, (2 * D2, H2), dtype=jnp.float32) * 0.02
    bias2 = jax.random.normal(k_b2, (1, H2), dtype=jnp.float32) * 0.01

    out2 = jax.block_until_ready(
        fenda_head_apply(local2, global2, w_cat2, bias2,
                         FendaJoinMode.CONCATENATE))
    ref2 = fenda_head_forward_ref(local2, global2, w_cat2, bias2,
                                  FendaJoinMode.CONCATENATE)
    assert out2.shape == (B2, H2)
    assert jnp.allclose(out2, ref2, atol=1e-3, rtol=1e-3)

    # Case 3: bf16 inputs (dtype-aware sublane rounding: tm rounds to 16).
    B3, D3, H3 = 4, 256, 128
    k_l3, k_g3, k_w3, k_b3 = jax.random.split(jax.random.PRNGKey(2), 4)
    local3 = jax.random.normal(k_l3, (B3, D3), dtype=jnp.float32).astype(jnp.bfloat16)
    global3 = jax.random.normal(k_g3, (B3, D3), dtype=jnp.float32).astype(jnp.bfloat16)
    w_cat3 = (jax.random.normal(k_w3, (2 * D3, H3), dtype=jnp.float32) * 0.02
              ).astype(jnp.bfloat16)
    bias3 = (jax.random.normal(k_b3, (1, H3), dtype=jnp.float32) * 0.01
             ).astype(jnp.bfloat16)

    out3 = jax.block_until_ready(
        fenda_head_apply(local3, global3, w_cat3, bias3,
                         FendaJoinMode.CONCATENATE))
    ref3 = fenda_head_forward_ref(local3, global3, w_cat3, bias3,
                                  FendaJoinMode.CONCATENATE)
    assert out3.shape == (B3, H3)
    assert jnp.allclose(out3.astype(jnp.float32), ref3.astype(jnp.float32),
                        atol=3e-2, rtol=3e-2)

    print("KERNEL_OK")
</pallas_src>

<mosaic_0001>
module attributes {stable_mosaic.version = 11 : i64} {
  func.func @_fenda_concat_kernel_nok(%arg0: i32, %arg1: i32, %arg2: memref<8x384xf32, #tpu.memory_space<vmem>>, %arg3: memref<8x384xf32, #tpu.memory_space<vmem>>, %arg4: memref<384x128xf32, #tpu.memory_space<vmem>>, %arg5: memref<384x128xf32, #tpu.memory_space<vmem>>, %arg6: memref<1x128xf32, #tpu.memory_space<vmem>>, %arg7: memref<8x128xf32, #tpu.memory_space<vmem>>) attributes {dimension_semantics = [#tpu.dimension_semantics<parallel>, #tpu.dimension_semantics<parallel>], iteration_bounds = array<i64: 1, 2>, scalar_prefetch = 0 : i64, scratch_operands = 0 : i64, tpu.core_type = #tpu.core_type<tc>, window_params = [{transform_indices = @transform_0, window_bounds = array<i64: 8, 384>}, {transform_indices = @transform_1, window_bounds = array<i64: 8, 384>}, {transform_indices = @transform_2, window_bounds = array<i64: 384, 128>}, {transform_indices = @transform_3, window_bounds = array<i64: 384, 128>}, {transform_indices = @transform_4, window_bounds = array<i64: 1, 128>}, {transform_indices = @transform_5, window_bounds = array<i64: 8, 128>}]} {
    %c0 = arith.constant 0 : index
    %c0_0 = arith.constant 0 : index
    %0 = vector.load %arg2[%c0, %c0_0] : memref<8x384xf32, #tpu.memory_space<vmem>>, vector<8x384xf32>
    %c0_1 = arith.constant 0 : index
    %c0_2 = arith.constant 0 : index
    %1 = vector.load %arg4[%c0_1, %c0_2] : memref<384x128xf32, #tpu.memory_space<vmem>>, vector<384x128xf32>
    %cst = arith.constant dense<0.000000e+00> : vector<8x128xf32>
    %2 = tpu.matmul %0, %1, %cst {dimension_numbers = #tpu.dot_dimension_numbers<[1], [0], [0], [1], [0, 0, 1, 1], [], []>} : vector<8x384xf32>, vector<384x128xf32>, vector<8x128xf32> -> vector<8x128xf32>
    %c0_3 = arith.constant 0 : index
    %c0_4 = arith.constant 0 : index
    %3 = vector.load %arg3[%c0_3, %c0_4] : memref<8x384xf32, #tpu.memory_space<vmem>>, vector<8x384xf32>
    %c0_5 = arith.constant 0 : index
    %c0_6 = arith.constant 0 : index
    %4 = vector.load %arg5[%c0_5, %c0_6] : memref<384x128xf32, #tpu.memory_space<vmem>>, vector<384x128xf32>
    %cst_7 = arith.constant dense<0.000000e+00> : vector<8x128xf32>
    %5 = tpu.matmul %3, %4, %cst_7 {dimension_numbers = #tpu.dot_dimension_numbers<[1], [0], [0], [1], [0, 0, 1, 1], [], []>} : vector<8x384xf32>, vector<384x128xf32>, vector<8x128xf32> -> vector<8x128xf32>
    %6 = arith.addf %2, %5 : vector<8x128xf32>
    %c0_8 = arith.constant 0 : index
    %c0_9 = arith.constant 0 : index
    %7 = vector.load %arg6[%c0_8, %c0_9] : memref<1x128xf32, #tpu.memory_space<vmem>>, vector<1x128xf32>
    %8 = vector.broadcast %7 : vector<1x128xf32> to vector<8x128xf32>
    %9 = arith.addf %6, %8 : vector<8x128xf32>
    %c0_10 = arith.constant 0 : index
    %c0_11 = arith.constant 0 : index
    %10 = vector.load %arg7[%c0_10, %c0_11] : memref<8x128xf32, #tpu.memory_space<vmem>>, vector<8x128xf32>
    tpu.vector_store %arg7[%c0_10, %c0_11], %9 {strides = array<i32>} : memref<8x128xf32, #tpu.memory_space<vmem>>, vector<8x128xf32>,
    return
  }
  func.func @transform_0(%arg0: i32, %arg1: i32) -> (i32, i32) {
    %c0_i32 = arith.constant 0 : i32
    %c0_i32_0 = arith.constant 0 : i32
    return %arg0, %c0_i32 : i32, i32
  }
  func.func @transform_1(%arg0: i32, %arg1: i32) -> (i32, i32) {
    %c0_i32 = arith.constant 0 : i32
    %c0_i32_0 = arith.constant 0 : i32
    return %arg0, %c0_i32 : i32, i32
  }
  func.func @transform_2(%arg0: i32, %arg1: i32) -> (i32, i32) {
    %c0_i32 = arith.constant 0 : i32
    %c0_i32_0 = arith.constant 0 : i32
    return %c0_i32, %arg1 : i32, i32
  }
  func.func @transform_3(%arg0: i32, %arg1: i32) -> (i32, i32) {
    %c0_i32 = arith.constant 0 : i32
    %c0_i32_0 = arith.constant 0 : i32
    return %c0_i32, %arg1 : i32, i32
  }
  func.func @transform_4(%arg0: i32, %arg1: i32) -> (i32, i32) {
    %c0_i32 = arith.constant 0 : i32
    %c0_i32_0 = arith.constant 0 : i32
    return %c0_i32, %arg1 : i32, i32
  }
  func.func @transform_5(%arg0: i32, %arg1: i32) -> (i32, i32) {
    %c0_i32 = arith.constant 0 : i32
    return %arg0, %arg1 : i32, i32
  }
}

</mosaic_0001>

<llo_original>
// kernel: fenda_head_forward.1
$region0: #{fenda_head_forward.1}
  #allocation0 [shape = 'u32[]', space=smem, size = 0x4, offset = 0x4, fixed_abs, tag = 'smem constant byte address 0x4 - core index']
  #allocation1 [shape = 'u32[144,128]{1,0:T(1,128)}', space=vmem, size = 0x12000, scoped, tag = 'internal scratch']
  %s0 = inlined_call_operand.hbm [shape: f32[8,384], index: 0, kind: input, shape index: {}]
  %s1 = inlined_call_operand.hbm [shape: f32[8,384], index: 1, kind: input, shape index: {}]
  %s2 = inlined_call_operand.hbm [shape: f32[384,256], index: 2, kind: input, shape index: {}]
  %s3 = inlined_call_operand.hbm [shape: f32[384,256], index: 3, kind: input, shape index: {}]
  %s4 = inlined_call_operand.vmem [shape: f32[1,256], index: 4, kind: input, shape index: {}]
  %s5 = inlined_call_operand.hbm [shape: f32[8,256], index: 5, kind: output, shape index: {}]
  %s6 = sld [smem:[#allocation0]]
  $region69: #{fenda_head_forward.1} parent=0
    _
  %s8 = ssub.s32 1, %s6
  %s9 = scalar_select 0, %s8, %s6
  $region1: #{fenda_head_forward.1} parent=0
    #allocation2 [shape = 'u8[12288]{0}', space=vmem, size = 0x3000, scoped, tag = 'input window, operand 0, single buffered']
    #allocation3 [shape = 's32[2]{0}', space=sflag, size = 0x8, scoped, tag = 'scoped memory for fenda_head_forward.1']
    #allocation4 [shape = 's32[2]{0}', space=sflag, size = 0x8, scoped, tag = 'scoped memory for fenda_head_forward.1']
    #allocation5 [shape = 'u8[12288]{0}', space=vmem, size = 0x3000, scoped, tag = 'input window, operand 1, single buffered']
    #allocation6 [shape = 's32[1]{0}', space=sflag, size = 0x4, scoped, tag = 'scoped memory for fenda_head_forward.1']
    #allocation7 [shape = 'u8[393216]{0}', space=vmem, size = 0x60000, scoped, tag = 'input window, operand 2']
    #allocation8 [shape = 'u8[393216]{0}', space=vmem, size = 0x60000, scoped, tag = 'input window, operand 3']
    #allocation9 [shape = 'u8[8192]{0}', space=vmem, size = 0x2000, scoped, tag = 'output window, operand 0']
    %10 = vsyncpa [#allocation3], 0
    %11 = vsyncpa [#allocation6], 0
    %12 = vsyncpa [#allocation4], 0
    %s13 = scalar_lea.sflag [#allocation4], 1
    %14 = vsyncpa %s13, 0
    loop: start=0, step=1, limit=4
    $region2: #{fenda_head_forward.1} parent=1 // loop_pre_header
      _
    $region3: #{fenda_head_forward.1} parent=1 // loop_header
      %s16 = sphi 0, %s20
      %p17 = scmp.ge.s32.totalorder %s16, 4
      %s23 = sphi 0, %s35
      %s24 = sphi 0, %s31
      %s25 = sphi 0, %s23
      %s26 = sphi 0, %s24
      %s27 = sphi 0, %s25
      %s28 = sphi 0, %s26
      %s38 = sphi 0, %s40
      %s41 = sphi 0, %s38
      %s42 = sphi 0, %s41
      %s58 = sphi 0, %s42
      %s64 = sphi 0, %s66
      %s67 = sphi 0, %s64
      %s68 = sphi 0, %s67
      %s84 = sphi 0, %s68
      %s90 = sphi 0, %s92
      %s93 = sphi 0, %s90
      %s94 = sphi 0, %s93
      %s110 = sphi 0, %s94
      %s116 = sphi 0, %s118
      %s119 = sphi 0, %s116
      %s120 = sphi 0, %s119
      %s136 = sphi 0, %s120
      %s142 = sphi 0, %s144
      %s145 = sphi 0, %s142
      %s146 = sphi 0, %s145
      %s162 = sphi 0, %s146
      %s170 = sphi 0, %s172
      %s173 = sphi 0, %s170
      %s174 = sphi 0, %s173
      %s190 = sphi 0, %s174
    $region4: #{fenda_head_forward.1} parent=1 // loop_header_branch
      %19 = sbr.rel (%p17) target = $region8
    $region5: #{fenda_head_forward.1} parent=1 // loop_body
      %s21 = ssub.s32 %s16, 1
      %s22 = ssub.s32 %s16, 2
      %s29 = sadd.s32 1, %s24
      %p30 = scmp.ge.s32.totalorder %s29, 2
      %s31 = scalar_select %p30, 0, %s29
      %s32 = sadd.s32 1, %s23
      %s33 = scalar_select %p30, %s32, %s23
      %p34 = scmp.ge.s32.totalorder %s33, 1
      %s35 = scalar_select %p34, 0, %s33
      %s36 = ssub.s32 %s23, %s35
      %p37 = scmp.eq.s32.totalorder %s36, 0
      %s39 = sadd.s32 %s38, 1
      %s40 = scalar_select %p37, %s38, %s39
      %p43 = pneg %p37
      %p44 = scmp.eq.s32.totalorder %s16, 1
      %p45 = por %p43, %p44
      %p46 = scmp.ne.s32.totalorder %s38, %s41
      %p47 = scmp.eq.s32.totalorder %s16, 0
      %p48 = por %p46, %p47
      %p49 = scmp.ne.s32.totalorder %s38, %s41
      %p50 = scmp.eq.s32.totalorder %s21, 1
      %p51 = por %p49, %p50
      %p52 = scmp.ne.s32.totalorder %s41, %s42
      %p53 = scmp.eq.s32.totalorder %s21, 0
      %p54 = por %p52, %p53
      %p55 = scmp.ne.s32.totalorder %s41, %s42
      %p56 = scmp.eq.s32.totalorder %s22, 1
      %p57 = por %p55, %p56
      %p59 = scmp.ne.s32.totalorder %s42, %s58
      %p60 = scmp.eq.s32.totalorder %s22, 0
      %p61 = por %p59, %p60
      %s62 = ssub.s32 %s23, %s35
      %p63 = scmp.eq.s32.totalorder %s62, 0
      %s65 = sadd.s32 %s64, 1
      %s66 = scalar_select %p63, %s64, %s65
      %p69 = pneg %p63
      %p70 = scmp.eq.s32.totalorder %s16, 1
      %p71 = por %p69, %p70
      %p72 = scmp.ne.s32.totalorder %s64, %s67
      %p73 = scmp.eq.s32.totalorder %s16, 0
      %p74 = por %p72, %p73
      %p75 = scmp.ne.s32.totalorder %s64, %s67
      %p76 = scmp.eq.s32.totalorder %s21, 1
      %p77 = por %p75, %p76
      %p78 = scmp.ne.s32.totalorder %s67, %s68
      %p79 = scmp.eq.s32.totalorder %s21, 0
      %p80 = por %p78, %p79
      %p81 = scmp.ne.s32.totalorder %s67, %s68
      %p82 = scmp.eq.s32.totalorder %s22, 1
      %p83 = por %p81, %p82
      %p85 = scmp.ne.s32.totalorder %s68, %s84
      %p86 = scmp.eq.s32.totalorder %s22, 0
      %p87 = por %p85, %p86
      %s88 = ssub.s32 %s24, %s31
      %p89 = scmp.eq.s32.totalorder %s88, 0
      %s91 = sadd.s32 %s90, 1
      %s92 = scalar_select %p89, %s90, %s91
      %p95 = pneg %p89
      %p96 = scmp.eq.s32.totalorder %s16, 1
      %p97 = por %p95, %p96
      %p98 = scmp.ne.s32.totalorder %s90, %s93
      %p99 = scmp.eq.s32.totalorder %s16, 0
      %p100 = por %p98, %p99
      %p101 = scmp.ne.s32.totalorder %s90, %s93
      %p102 = scmp.eq.s32.totalorder %s21, 1
      %p103 = por %p101, %p102
      %p104 = scmp.ne.s32.totalorder %s93, %s94
      %p105 = scmp.eq.s32.totalorder %s21, 0
      %p106 = por %p104, %p105
      %p107 = scmp.ne.s32.totalorder %s93, %s94
      %p108 = scmp.eq.s32.totalorder %s22, 1
      %p109 = por %p107, %p108
      %p111 = scmp.ne.s32.totalorder %s94, %s110
      %p112 = scmp.eq.s32.totalorder %s22, 0
      %p113 = por %p111, %p112
      %s114 = ssub.s32 %s24, %s31
      %p115 = scmp.eq.s32.totalorder %s114, 0
      %s117 = sadd.s32 %s116, 1
      %s118 = scalar_select %p115, %s116, %s117
      %p121 = pneg %p115
      %p122 = scmp.eq.s32.totalorder %s16, 1
      %p123 = por %p121, %p122
      %p124 = scmp.ne.s32.totalorder %s116, %s119
      %p125 = scmp.eq.s32.totalorder %s16, 0
      %p126 = por %p124, %p125
      %p127 = scmp.ne.s32.totalorder %s116, %s119
      %p128 = scmp.eq.s32.totalorder %s21, 1
      %p129 = por %p127, %p128
      %p130 = scmp.ne.s32.totalorder %s119, %s120
      %p131 = scmp.eq.s32.totalorder %s21, 0
      %p132 = por %p130, %p131
      %p133 = scmp.ne.s32.totalorder %s119, %s120
      %p134 = scmp.eq.s32.totalorder %s22, 1
      %p135 = por %p133, %p134
      %p137 = scmp.ne.s32.totalorder %s120, %s136
      %p138 = scmp.eq.s32.totalorder %s22, 0
      %p139 = por %p137, %p138
      %s140 = ssub.s32 %s24, %s31
      %p141 = scmp.eq.s32.totalorder %s140, 0
      %s143 = sadd.s32 %s142, 1
      %s144 = scalar_select %p141, %s142, %s143
      %p147 = pneg %p141
      %p148 = scmp.eq.s32.totalorder %s16, 1
      %p149 = por %p147, %p148
      %p150 = scmp.ne.s32.totalorder %s142, %s145
      %p151 = scmp.eq.s32.totalorder %s16, 0
      %p152 = por %p150, %p151
      %p153 = scmp.ne.s32.totalorder %s142, %s145
      %p154 = scmp.eq.s32.totalorder %s21, 1
      %p155 = por %p153, %p154
      %p156 = scmp.ne.s32.totalorder %s145, %s146
      %p157 = scmp.eq.s32.totalorder %s21, 0
      %p158 = por %p156, %p157
      %p159 = scmp.ne.s32.totalorder %s145, %s146
      %p160 = scmp.eq.s32.totalorder %s22, 1
      %p161 = por %p159, %p160
      %p163 = scmp.ne.s32.totalorder %s146, %s162
      %p164 = scmp.eq.s32.totalorder %s22, 0
      %p165 = por %p163, %p164
      %s166 = ssub.s32 %s23, %s35
      %s167 = ssub.s32 %s24, %s31
      %s168 = sor.u32 %s166, %s167
      %p169 = scmp.eq.s32.totalorder %s168, 0
      %s171 = sadd.s32 %s170, 1
      %s172 = scalar_select %p169, %s170, %s171
      %p175 = pneg %p169
      %p176 = scmp.eq.s32.totalorder %s16, 1
      %p177 = por %p175, %p176
      %p178 = scmp.ne.s32.totalorder %s170, %s173
      %p179 = scmp.eq.s32.totalorder %s16, 0
      %p180 = por %p178, %p179
      %p181 = scmp.ne.s32.totalorder %s170, %s173
      %p182 = scmp.eq.s32.totalorder %s21, 1
      %p183 = por %p181, %p182
      %p184 = scmp.ne.s32.totalorder %s173, %s174
      %p185 = scmp.eq.s32.totalorder %s21, 0
      %p186 = por %p184, %p185
      %p187 = scmp.ne.s32.totalorder %s173, %s174
      %p188 = scmp.eq.s32.totalorder %s22, 1
      %p189 = por %p187, %p188
      %p191 = scmp.ne.s32.totalorder %s174, %s190
      %p192 = scmp.eq.s32.totalorder %s22, 0
      %p193 = por %p191, %p192
      %p194 = scmp.le.s32.totalorder 1, %s16
      %p195 = scmp.lt.s32.totalorder %s16, 3
      %p196 = pnand %p194, %p195
      %p197 = pneg %p196
      // Predicated region
      $region9: #{fenda_head_forward.1} parent=5 // pred_check
        _
      $region10: #{fenda_head_forward.1} parent=5 // pred_check_branch
        %199 = sbr.rel (%p196) target = $region12
      $region11: #{fenda_head_forward.1} parent=5 // pred_region
        %s200 = ssub.s32 %s16, 1
        // Predicated region
        $region13: #{fenda_head_forward.1} parent=11 // pred_check
          %p201 = pneg %p54
        $region14: #{fenda_head_forward.1} parent=11 // pred_check_branch
          %203 = sbr.rel (%p201) target = $region16
        $region15: #{fenda_head_forward.1} parent=11 // pred_region
          %s205 = ssub.s32 384, 384
          %206 = vsyncadd [#allocation3], %s205
          %s207 = smul.addr %s25, 3
          %s208 = smul.addr %s207, 128
          %s209 = scalar_lea.hbm %s0, %s208
          %s211 = sshll.u32 [#allocation2], 4
          %s212 = int_to_ptr.vmem [resolvable:$true] %s211
          %214 = dma.hbm_to_vmem [thread:$0]  %s209, 384, %s212, [#allocation3]
        $region16: #{fenda_head_forward.1} parent=11 // pred_fallthru
          _
        // Predicated region
        $region17: #{fenda_head_forward.1} parent=11 // pred_check
          %p215 = pneg %p80
        $region18: #{fenda_head_forward.1} parent=11 // pred_check_branch
          %217 = sbr.rel (%p215) target = $region20
        $region19: #{fenda_head_forward.1} parent=11 // pred_region
          %s219 = ssub.s32 384, 384
          %220 = vsyncadd [#allocation6], %s219
          %s221 = smul.addr %s25, 3
          %s222 = smul.addr %s221, 128
          %s223 = scalar_lea.hbm %s1, %s222
          %s225 = sshll.u32 [#allocation5], 4
          %s226 = int_to_ptr.vmem [resolvable:$true] %s225
          %228 = dma.hbm_to_vmem [thread:$0]  %s223, 384, %s226, [#allocation6]
        $region20: #{fenda_head_forward.1} parent=11 // pred_fallthru
          _
      $region12: #{fenda_head_forward.1} parent=5 // pred_fallthru
        _
      %p229 = scmp.lt.s32.totalorder %s16, 2
      // Predicated region
      $region21: #{fenda_head_forward.1} parent=5 // pred_check
        %p230 = pneg %p229
      $region22: #{fenda_head_forward.1} parent=5 // pred_check_branch
        %232 = sbr.rel (%p230) target = $region24
      $region23: #{fenda_head_forward.1} parent=5 // pred_region
        // Predicated region
        $region25: #{fenda_head_forward.1} parent=23 // pred_check
          %p233 = pneg %p100
        $region26: #{fenda_head_forward.1} parent=23 // pred_check_branch
          %235 = sbr.rel (%p233) target = $region28
        $region27: #{fenda_head_forward.1} parent=23 // pred_region
          %s236 = sand.u32 %s16, 1
          %s237 = scalar_lea.sflag [#allocation3], %s236
          %s238 = sand.u32 %s90, 1
          %s239 = smul.addr %s238, 384
          %s240 = scalar_lea.vmem [#allocation7], %s239
          %s242 = ssub.s32 6144, 6144
          %243 = vsyncadd %s237, %s242
          %s244 = smul.addr %s24, 128
          %s245 = scalar_lea.hbm %s2, %s244
          %s246 = sshll.u32 %s240, 4
          %s247 = int_to_ptr.vmem [resolvable:$true] %s246
          %252 = dma.hbm_to_vmem [thread:$0]  %s245, 6144, %s247, %s237, 256, 128, 8
        $region28: #{fenda_head_forward.1} parent=23 // pred_fallthru
          _
        // Predicated region
        $region29: #{fenda_head_forward.1} parent=23 // pred_check
          %p253 = pneg %p126
        $region30: #{fenda_head_forward.1} parent=23 // pred_check_branch
          %255 = sbr.rel (%p253) target = $region32
        $region31: #{fenda_head_forward.1} parent=23 // pred_region
          %s256 = sand.u32 %s16, 1
          %s257 = scalar_lea.sflag [#allocation3], %s256
          %s258 = sand.u32 %s116, 1
          %s259 = smul.addr %s258, 384
          %s260 = scalar_lea.vmem [#allocation8], %s259
          %s262 = ssub.s32 6144, 6144
          %263 = vsyncadd %s257, %s262
          %s264 = smul.addr %s24, 128
          %s265 = scalar_lea.hbm %s3, %s264
          %s266 = sshll.u32 %s260, 4
          %s267 = int_to_ptr.vmem [resolvable:$true] %s266
          %272 = dma.hbm_to_vmem [thread:$0]  %s265, 6144, %s267, %s257, 256, 128, 8
        $region32: #{fenda_head_forward.1} parent=23 // pred_fallthru
          _
        // Predicated region
        $region33: #{fenda_head_forward.1} parent=23 // pred_check
          %p273 = pneg %p152
        $region34: #{fenda_head_forward.1} parent=23 // pred_check_branch
          %275 = sbr.rel (%p273) target = $region36
        $region35: #{fenda_head_forward.1} parent=23 // pred_region
          %p276 = scmp.lt.s32.totalorder %s24, 1
          %s277 = scalar_select %p276, %s24, 1
          %s278 = scalar_lea.vmem %s4, %s277
        $region36: #{fenda_head_forward.1} parent=23 // pred_fallthru
          _
      $region24: #{fenda_head_forward.1} parent=5 // pred_fallthru
        _
      %p279 = scmp.le.s32.totalorder 1, %s16
      %p280 = scmp.lt.s32.totalorder %s16, 3
      %p281 = pnand %p279, %p280
      %p282 = pneg %p281
      // Predicated region
      $region37: #{fenda_head_forward.1} parent=5 // pred_check
        _
      $region38: #{fenda_head_forward.1} parent=5 // pred_check_branch
        %284 = sbr.rel (%p281) target = $region40
      $region39: #{fenda_head_forward.1} parent=5 // pred_region
        %s285 = ssub.s32 %s16, 1
        // Predicated region
        $region41: #{fenda_head_forward.1} parent=39 // pred_check
          %p286 = pneg %p54
        $region42: #{fenda_head_forward.1} parent=39 // pred_check_branch
          %288 = sbr.rel (%p286) target = $region44
        $region43: #{fenda_head_forward.1} parent=39 // pred_region
          %289 = dma.done [#allocation3], 384
        $region44: #{fenda_head_forward.1} parent=39 // pred_fallthru
          _
        // Predicated region
        $region45: #{fenda_head_forward.1} parent=39 // pred_check
          %p290 = pneg %p80
        $region46: #{fenda_head_forward.1} parent=39 // pred_check_branch
          %292 = sbr.rel (%p290) target = $region48
        $region47: #{fenda_head_forward.1} parent=39 // pred_region
          %293 = dma.done [#allocation6], 384
        $region48: #{fenda_head_forward.1} parent=39 // pred_fallthru
          _
        %s294 = sand.u32 %s21, 1
        %s295 = scalar_lea.sflag [#allocation3], %s294
        %s296 = sand.u32 %s93, 1
        %s297 = smul.addr %s296, 384
        %s298 = scalar_lea.vmem [#allocation7], %s297
        // Predicated region
        $region49: #{fenda_head_forward.1} parent=39 // pred_check
          %p299 = pneg %p106
        $region50: #{fenda_head_forward.1} parent=39 // pred_check_branch
          %301 = sbr.rel (%p299) target = $region52
        $region51: #{fenda_head_forward.1} parent=39 // pred_region
          %302 = dma.done %s295, 6144
        $region52: #{fenda_head_forward.1} parent=39 // pred_fallthru
          _
        %s303 = sand.u32 %s21, 1
        %s304 = scalar_lea.sflag [#allocation3], %s303
        %s305 = sand.u32 %s119, 1
        %s306 = smul.addr %s305, 384
        %s307 = scalar_lea.vmem [#allocation8], %s306
        // Predicated region
        $region53: #{fenda_head_forward.1} parent=39 // pred_check
          %p308 = pneg %p132
        $region54: #{fenda_head_forward.1} parent=39 // pred_check_branch
          %310 = sbr.rel (%p308) target = $region56
        $region55: #{fenda_head_forward.1} parent=39 // pred_region
          %311 = dma.done %s304, 6144
        $region56: #{fenda_head_forward.1} parent=39 // pred_fallthru
          _
        %p312 = pneg %p54
        %p313 = pneg %p51
        %p314 = pneg %p80
        %p315 = pneg %p77
        %s316 = sand.u32 %s21, 1
        %s317 = scalar_lea.sflag [#allocation3], %s316
        %s318 = sand.u32 %s93, 1
        %s319 = smul.addr %s318, 384
        %s320 = scalar_lea.vmem [#allocation7], %s319
        %p321 = pneg %p106
        %p322 = pneg %p103
        %s323 = sand.u32 %s21, 1
        %s324 = scalar_lea.sflag [#allocation3], %s323
        %s325 = sand.u32 %s119, 1
        %s326 = smul.addr %s325, 384
        %s327 = scalar_lea.vmem [#allocation8], %s326
        %p328 = pneg %p132
        %p329 = pneg %p129
        %p330 = scmp.lt.s32.totalorder %s26, 1
        %s331 = scalar_select %p330, %s26, 1
        %s332 = scalar_lea.vmem %s4, %s331
        %p333 = pneg %p158
        %p334 = pneg %p155
        %p335 = pneg %p186
        %p336 = pneg %p183
        %s337 = sand.u32 %s173, 1
        %s338 = scalar_lea.sflag [#allocation4], %s337
        %s339 = sand.u32 %s173, 1
        %s340 = smul.addr %s339, 8
        %s341 = scalar_lea.vmem [#allocation9], %s340
        %p342 = scmp.lt.s32.totalorder %s26, 1
        %s343 = scalar_select %p342, %s26, 1
        %s344 = scalar_lea.vmem %s4, %s343
        %v345 = vld [vmem:[#allocation2] sm:$0xff]
        %v346 = vld [vmem:[#allocation2 + $0x8] sm:$0xff]
        %v347 = vld [vmem:[#allocation2 + $0x10] sm:$0xff]
        %v348 = vld [vmem:[%s298] sm:$0xff]
        %v349 = vld [vmem:[%s298 + $0x8] sm:$0xff]
        %v350 = vld [vmem:[%s298 + $0x10] sm:$0xff]
        %v351 = vld [vmem:[%s298 + $0x18] sm:$0xff]
        %v352 = vld [vmem:[%s298 + $0x20] sm:$0xff]
        %v353 = vld [vmem:[%s298 + $0x28] sm:$0xff]
        %v354 = vld [vmem:[%s298 + $0x30] sm:$0xff]
        %v355 = vld [vmem:[%s298 + $0x38] sm:$0xff]
        %v356 = vld [vmem:[%s298 + $0x40] sm:$0xff]
        %v357 = vld [vmem:[%s298 + $0x48] sm:$0xff]
        %v358 = vld [vmem:[%s298 + $0x50] sm:$0xff]
        %v359 = vld [vmem:[%s298 + $0x58] sm:$0xff]
        %v360 = vld [vmem:[%s298 + $0x60] sm:$0xff]
        %v361 = vld [vmem:[%s298 + $0x68] sm:$0xff]
        %v362 = vld [vmem:[%s298 + $0x70] sm:$0xff]
        %v363 = vld [vmem:[%s298 + $0x78] sm:$0xff]
        %v364 = vld [vmem:[%s298 + $0x80] sm:$0xff]
        %v365 = vld [vmem:[%s298 + $0x88] sm:$0xff]
        %v366 = vld [vmem:[%s298 + $0x90] sm:$0xff]
        %v367 = vld [vmem:[%s298 + $0x98] sm:$0xff]
        %v368 = vld [vmem:[%s298 + $0xa0] sm:$0xff]
        %v369 = vld [vmem:[%s298 + $0xa8] sm:$0xff]
        %v370 = vld [vmem:[%s298 + $0xb0] sm:$0xff]
        %v371 = vld [vmem:[%s298 + $0xb8] sm:$0xff]
        %v372 = vld [vmem:[%s298 + $0xc0] sm:$0xff]
        %v373 = vld [vmem:[%s298 + $0xc8] sm:$0xff]
        %v374 = vld [vmem:[%s298 + $0xd0] sm:$0xff]
        %v375 = vld [vmem:[%s298 + $0xd8] sm:$0xff]
        %v376 = vld [vmem:[%s298 + $0xe0] sm:$0xff]
        %v377 = vld [vmem:[%s298 + $0xe8] sm:$0xff]
        %v378 = vld [vmem:[%s298 + $0xf0] sm:$0xff]
        %v379 = vld [vmem:[%s298 + $0xf8] sm:$0xff]
        %v380 = vld [vmem:[%s298 + $0x100] sm:$0xff]
        %v381 = vld [vmem:[%s298 + $0x108] sm:$0xff]
        %v382 = vld [vmem:[%s298 + $0x110] sm:$0xff]
        %v383 = vld [vmem:[%s298 + $0x118] sm:$0xff]
        %v384 = vld [vmem:[%s298 + $0x120] sm:$0xff]
        %v385 = vld [vmem:[%s298 + $0x128] sm:$0xff]
        %v386 = vld [vmem:[%s298 + $0x130] sm:$0xff]
        %v387 = vld [vmem:[%s298 + $0x138] sm:$0xff]
        %v388 = vld [vmem:[%s298 + $0x140] sm:$0xff]
        %v389 = vld [vmem:[%s298 + $0x148] sm:$0xff]
        %v390 = vld [vmem:[%s298 + $0x150] sm:$0xff]
        %v391 = vld [vmem:[%s298 + $0x158] sm:$0xff]
        %v392 = vld [vmem:[%s298 + $0x160] sm:$0xff]
        %v393 = vld [vmem:[%s298 + $0x168] sm:$0xff]
        %v394 = vld [vmem:[%s298 + $0x170] sm:$0xff]
        %v395 = vld [vmem:[%s298 + $0x178] sm:$0xff]
        %v396 = vld [vmem:[#allocation5] sm:$0xff]
        %v397 = vld [vmem:[#allocation5 + $0x8] sm:$0xff]
        %v398 = vld [vmem:[#allocation5 + $0x10] sm:$0xff]
        %v399 = vld [vmem:[%s307] sm:$0xff]
        %v400 = vld [vmem:[%s307 + $0x8] sm:$0xff]
        %v401 = vld [vmem:[%s307 + $0x10] sm:$0xff]
        %v402 = vld [vmem:[%s307 + $0x18] sm:$0xff]
        %v403 = vld [vmem:[%s307 + $0x20] sm:$0xff]
        %v404 = vld [vmem:[%s307 + $0x28] sm:$0xff]
        %v405 = vld [vmem:[%s307 + $0x30] sm:$0xff]
        %v406 = vld [vmem:[%s307 + $0x38] sm:$0xff]
        %v407 = vld [vmem:[%s307 + $0x40] sm:$0xff]
        %v408 = vld [vmem:[%s307 + $0x48] sm:$0xff]
        %v409 = vld [vmem:[%s307 + $0x50] sm:$0xff]
        %v410 = vld [vmem:[%s307 + $0x58] sm:$0xff]
        %v411 = vld [vmem:[%s307 + $0x60] sm:$0xff]
        %v412 = vld [vmem:[%s307 + $0x68] sm:$0xff]
        %v413 = vld [vmem:[%s307 + $0x70] sm:$0xff]
        %v414 = vld [vmem:[%s307 + $0x78] sm:$0xff]
        %v415 = vld [vmem:[%s307 + $0x80] sm:$0xff]
        %v416 = vld [vmem:[%s307 + $0x88] sm:$0xff]
        %v417 = vld [vmem:[%s307 + $0x90] sm:$0xff]
        %v418 = vld [vmem:[%s307 + $0x98] sm:$0xff]
        %v419 = vld [vmem:[%s307 + $0xa0] sm:$0xff]
        %v420 = vld [vmem:[%s307 + $0xa8] sm:$0xff]
        %v421 = vld [vmem:[%s307 + $0xb0] sm:$0xff]
        %v422 = vld [vmem:[%s307 + $0xb8] sm:$0xff]
        %v423 = vld [vmem:[%s307 + $0xc0] sm:$0xff]
        %v424 = vld [vmem:[%s307 + $0xc8] sm:$0xff]
        %v425 = vld [vmem:[%s307 + $0xd0] sm:$0xff]
        %v426 = vld [vmem:[%s307 + $0xd8] sm:$0xff]
        %v427 = vld [vmem:[%s307 + $0xe0] sm:$0xff]
        %v428 = vld [vmem:[%s307 + $0xe8] sm:$0xff]
        %v429 = vld [vmem:[%s307 + $0xf0] sm:$0xff]
        %v430 = vld [vmem:[%s307 + $0xf8] sm:$0xff]
        %v431 = vld [vmem:[%s307 + $0x100] sm:$0xff]
        %v432 = vld [vmem:[%s307 + $0x108] sm:$0xff]
        %v433 = vld [vmem:[%s307 + $0x110] sm:$0xff]
        %v434 = vld [vmem:[%s307 + $0x118] sm:$0xff]
        %v435 = vld [vmem:[%s307 + $0x120] sm:$0xff]
        %v436 = vld [vmem:[%s307 + $0x128] sm:$0xff]
        %v437 = vld [vmem:[%s307 + $0x130] sm:$0xff]
        %v438 = vld [vmem:[%s307 + $0x138] sm:$0xff]
        %v439 = vld [vmem:[%s307 + $0x140] sm:$0xff]
        %v440 = vld [vmem:[%s307 + $0x148] sm:$0xff]
        %v441 = vld [vmem:[%s307 + $0x150] sm:$0xff]
        %v442 = vld [vmem:[%s307 + $0x158] sm:$0xff]
        %v443 = vld [vmem:[%s307 + $0x160] sm:$0xff]
        %v444 = vld [vmem:[%s307 + $0x168] sm:$0xff]
        %v445 = vld [vmem:[%s307 + $0x170] sm:$0xff]
        %v446 = vld [vmem:[%s307 + $0x178] sm:$0xff]
        %447 = vmatprep.subr.mxu0 0.0
        %448 = vmatpush1.msra.mxu0 %v399
        %449 = vmatprep.subr.mxu0 0.0
        %450 = vmatpush1.msra.mxu0 %v400
        %451 = vmatprep.subr.mxu0 0.0
        %452 = vmatpush1.msra.mxu0 %v401
        %453 = vmatprep.subr.mxu0 0.0
        %454 = vmatpush1.msra.mxu0 %v402
        %455 = vmatprep.subr.mxu0 0.0
        %456 = vmatpush1.msra.mxu0 %v403
        %457 = vmatprep.subr.mxu0 0.0
        %458 = vmatpush1.msra.mxu0 %v404
        %459 = vmatprep.subr.mxu0 0.0
        %460 = vmatpush1.msra.mxu0 %v405
        %461 = vmatprep.subr.mxu0 0.0
        %462 = vmatpush1.msra.mxu0 %v406
        %463 = vmatprep.subr.mxu0 0.0
        %464 = vmatpush1.msra.mxu0 %v407
        %465 = vmatprep.subr.mxu0 0.0
        %466 = vmatpush1.msra.mxu0 %v408
        %467 = vmatprep.subr.mxu0 0.0
        %468 = vmatpush1.msra.mxu0 %v409
        %469 = vmatprep.subr.mxu0 0.0
        %470 = vmatpush1.msra.mxu0 %v410
        %471 = vmatprep.subr.mxu0 0.0
        %472 = vmatpush1.msra.mxu0 %v411
        %473 = vmatprep.subr.mxu0 0.0
        %474 = vmatpush1.msra.mxu0 %v412
        %475 = vmatprep.subr.mxu0 0.0
        %476 = vmatpush1.msra.mxu0 %v413
        %477 = vmatprep.subr.mxu0 0.0
        %478 = vmatpush1.msra.mxu0 %v414
        %479 = vmatprep.subr.mxu0 0.0
        %480 = vmatpush1.msra.mxu0 %v415
        %481 = vmatprep.subr.mxu0 0.0
        %482 = vmatpush1.msra.mxu0 %v416
        %483 = vmatprep.subr.mxu0 0.0
        %484 = vmatpush1.msra.mxu0 %v417
        %485 = vmatprep.subr.mxu0 0.0
        %486 = vmatpush1.msra.mxu0 %v418
        %487 = vmatprep.subr.mxu0 0.0
        %488 = vmatpush1.msra.mxu0 %v419
        %489 = vmatprep.subr.mxu0 0.0
        %490 = vmatpush1.msra.mxu0 %v420
        %491 = vmatprep.subr.mxu0 0.0
        %492 = vmatpush1.msra.mxu0 %v421
        %493 = vmatprep.subr.mxu0 0.0
        %494 = vmatpush1.msra.mxu0 %v422
        %495 = vmatprep.subr.mxu0 0.0
        %496 = vmatpush1.msra.mxu0 %v423
        %497 = vmatprep.subr.mxu0 0.0
        %498 = vmatpush1.msra.mxu0 %v424
        %499 = vmatprep.subr.mxu0 0.0
        %500 = vmatpush1.msra.mxu0 %v425
        %501 = vmatprep.subr.mxu0 0.0
        %502 = vmatpush1.msra.mxu0 %v426
        %503 = vmatprep.subr.mxu0 0.0
        %504 = vmatpush1.msra.mxu0 %v427
        %505 = vmatprep.subr.mxu0 0.0
        %506 = vmatpush1.msra.mxu0 %v428
        %507 = vmatprep.subr.mxu0 0.0
        %508 = vmatpush1.msra.mxu0 %v429
        %509 = vmatprep.subr.mxu0 0.0
        %510 = vmatpush1.msra.mxu0 %v430
        %511 = vmatprep.mubr.f32.mxu0 %v397
        %512 = vmatmul.mubr.f32.gmra.mrb[0].mxu0 %v396
        %v513 = vpop.f32.mrb[0].mxu0
        %v514 = vadd.f32 0.0, %v513
        %v515 = vpop.f32.mrb[0].mxu0
        %516 = vdwg.mxu0
        %517 = vmatprep.subr.mxu0 0.0
        %518 = vmatpush1.msra.mxu0 %v431
        %519 = vmatprep.subr.mxu0 0.0
        %520 = vmatpush1.msra.mxu0 %v432
        %521 = vmatprep.subr.mxu0 0.0
        %522 = vmatpush1.msra.mxu0 %v433
        %523 = vmatprep.subr.mxu0 0.0
        %524 = vmatpush1.msra.mxu0 %v434
        %525 = vmatprep.subr.mxu0 0.0
        %526 = vmatpush1.msra.mxu0 %v435
        %527 = vmatprep.subr.mxu0 0.0
        %528 = vmatpush1.msra.mxu0 %v436
        %529 = vmatprep.subr.mxu0 0.0
        %530 = vmatpush1.msra.mxu0 %v437
        %531 = vmatprep.subr.mxu0 0.0
        %532 = vmatpush1.msra.mxu0 %v438
        %533 = vmatprep.subr.mxu0 0.0
        %534 = vmatpush1.msra.mxu0 %v439
        %535 = vmatprep.subr.mxu0 0.0
        %536 = vmatpush1.msra.mxu0 %v440
        %537 = vmatprep.subr.mxu0 0.0
        %538 = vmatpush1.msra.mxu0 %v441
        %539 = vmatprep.subr.mxu0 0.0
        %540 = vmatpush1.msra.mxu0 %v442
        %541 = vmatprep.subr.mxu0 0.0
        %542 = vmatpush1.msra.mxu0 %v443
        %543 = vmatprep.subr.mxu0 0.0
        %544 = vmatpush1.msra.mxu0 %v444
        %545 = vmatprep.subr.mxu0 0.0
        %546 = vmatpush1.msra.mxu0 %v445
        %547 = vmatprep.subr.mxu0 0.0
        %548 = vmatpush1.msra.mxu0 %v446
        %549 = vmatprep.subr.mxu0 0.0
        %550 = vmatpush1.msra.mxu0 0.0
        %551 = vmatprep.subr.mxu0 0.0
        %552 = vmatpush1.msra.mxu0 0.0
        %553 = vmatprep.subr.mxu0 0.0
        %554 = vmatpush1.msra.mxu0 0.0
        %555 = vmatprep.subr.mxu0 0.0
        %556 = vmatpush1.msra.mxu0 0.0
        %557 = vmatprep.subr.mxu0 0.0
        %558 = vmatpush1.msra.mxu0 0.0
        %559 = vmatprep.subr.mxu0 0.0
        %560 = vmatpush1.msra.mxu0 0.0
        %561 = vmatprep.subr.mxu0 0.0
        %562 = vmatpush1.msra.mxu0 0.0
        %563 = vmatprep.subr.mxu0 0.0
        %564 = vmatpush1.msra.mxu0 0.0
        %565 = vmatprep.subr.mxu0 0.0
        %566 = vmatpush1.msra.mxu0 0.0
        %567 = vmatprep.subr.mxu0 0.0
        %568 = vmatpush1.msra.mxu0 0.0
        %569 = vmatprep.subr.mxu0 0.0
        %570 = vmatpush1.msra.mxu0 0.0
        %571 = vmatprep.subr.mxu0 0.0
        %572 = vmatpush1.msra.mxu0 0.0
        %573 = vmatprep.subr.mxu0 0.0
        %574 = vmatpush1.msra.mxu0 0.0
        %575 = vmatprep.subr.mxu0 0.0
        %576 = vmatpush1.msra.mxu0 0.0
        %577 = vmatprep.subr.mxu0 0.0
        %578 = vmatpush1.msra.mxu0 0.0
        %579 = vmatprep.subr.mxu0 0.0
        %580 = vmatpush1.msra.mxu0 0.0
        %581 = vmatprep.mubr.f32.mxu0 0.0
        %582 = vmatmul.mubr.f32.gmra.mrb[0].mxu0 %v398
        %v583 = vpop.f32.mrb[0].mxu0
        %v584 = vadd.f32 %v514, %v583
        %v585 = vpop.f32.mrb[0].mxu0
        %586 = vdwg.mxu0
        %587 = vmatprep.subr.mxu0 0.0
        %588 = vmatpush1.msra.mxu0 %v348
        %589 = vmatprep.subr.mxu0 0.0
        %590 = vmatpush1.msra.mxu0 %v349
        %591 = vmatprep.subr.mxu0 0.0
        %592 = vmatpush1.msra.mxu0 %v350
        %593 = vmatprep.subr.mxu0 0.0
        %594 = vmatpush1.msra.mxu0 %v351
        %595 = vmatprep.subr.mxu0 0.0
        %596 = vmatpush1.msra.mxu0 %v352
        %597 = vmatprep.subr.mxu0 0.0
        %598 = vmatpush1.msra.mxu0 %v353
        %599 = vmatprep.subr.mxu0 0.0
        %600 = vmatpush1.msra.mxu0 %v354
        %601 = vmatprep.subr.mxu0 0.0
        %602 = vmatpush1.msra.mxu0 %v355
        %603 = vmatprep.subr.mxu0 0.0
        %604 = vmatpush1.msra.mxu0 %v356
        %605 = vmatprep.subr.mxu0 0.0
        %606 = vmatpush1.msra.mxu0 %v357
        %607 = vmatprep.subr.mxu0 0.0
        %608 = vmatpush1.msra.mxu0 %v358
        %609 = vmatprep.subr.mxu0 0.0
        %610 = vmatpush1.msra.mxu0 %v359
        %611 = vmatprep.subr.mxu0 0.0
        %612 = vmatpush1.msra.mxu0 %v360
        %613 = vmatprep.subr.mxu0 0.0
        %614 = vmatpush1.msra.mxu0 %v361
        %615 = vmatprep.subr.mxu0 0.0
        %616 = vmatpush1.msra.mxu0 %v362
        %617 = vmatprep.subr.mxu0 0.0
        %618 = vmatpush1.msra.mxu0 %v363
        %619 = vmatprep.subr.mxu0 0.0
        %620 = vmatpush1.msra.mxu0 %v364
        %621 = vmatprep.subr.mxu0 0.0
        %622 = vmatpush1.msra.mxu0 %v365
        %623 = vmatprep.subr.mxu0 0.0
        %624 = vmatpush1.msra.mxu0 %v366
        %625 = vmatprep.subr.mxu0 0.0
        %626 = vmatpush1.msra.mxu0 %v367
        %627 = vmatprep.subr.mxu0 0.0
        %628 = vmatpush1.msra.mxu0 %v368
        %629 = vmatprep.subr.mxu0 0.0
        %630 = vmatpush1.msra.mxu0 %v369
        %631 = vmatprep.subr.mxu0 0.0
        %632 = vmatpush1.msra.mxu0 %v370
        %633 = vmatprep.subr.mxu0 0.0
        %634 = vmatpush1.msra.mxu0 %v371
        %635 = vmatprep.subr.mxu0 0.0
        %636 = vmatpush1.msra.mxu0 %v372
        %637 = vmatprep.subr.mxu0 0.0
        %638 = vmatpush1.msra.mxu0 %v373
        %639 = vmatprep.subr.mxu0 0.0
        %640 = vmatpush1.msra.mxu0 %v374
        %641 = vmatprep.subr.mxu0 0.0
        %642 = vmatpush1.msra.mxu0 %v375
        %643 = vmatprep.subr.mxu0 0.0
        %644 = vmatpush1.msra.mxu0 %v376
        %645 = vmatprep.subr.mxu0 0.0
        %646 = vmatpush1.msra.mxu0 %v377
        %647 = vmatprep.subr.mxu0 0.0
        %648 = vmatpush1.msra.mxu0 %v378
        %649 = vmatprep.subr.mxu0 0.0
        %650 = vmatpush1.msra.mxu0 %v379
        %651 = vmatprep.mubr.f32.mxu0 %v346
        %652 = vmatmul.mubr.f32.gmra.mrb[0].mxu0 %v345
        %v653 = vpop.f32.mrb[0].mxu0
        %v654 = vadd.f32 %v584, %v653
        %v655 = vpop.f32.mrb[0].mxu0
        %656 = vdwg.mxu0
        %657 = vmatprep.subr.mxu0 0.0
        %658 = vmatpush1.msra.mxu0 %v380
        %659 = vmatprep.subr.mxu0 0.0
        %660 = vmatpush1.msra.mxu0 %v381
        %661 = vmatprep.subr.mxu0 0.0
        %662 = vmatpush1.msra.mxu0 %v382
        %663 = vmatprep.subr.mxu0 0.0
        %664 = vmatpush1.msra.mxu0 %v383
        %665 = vmatprep.subr.mxu0 0.0
        %666 = vmatpush1.msra.mxu0 %v384
        %667 = vmatprep.subr.mxu0 0.0
        %668 = vmatpush1.msra.mxu0 %v385
        %669 = vmatprep.subr.mxu0 0.0
        %670 = vmatpush1.msra.mxu0 %v386
        %671 = vmatprep.subr.mxu0 0.0
        %672 = vmatpush1.msra.mxu0 %v387
        %673 = vmatprep.subr.mxu0 0.0
        %674 = vmatpush1.msra.mxu0 %v388
        %675 = vmatprep.subr.mxu0 0.0
        %676 = vmatpush1.msra.mxu0 %v389
        %677 = vmatprep.subr.mxu0 0.0
        %678 = vmatpush1.msra.mxu0 %v390
        %679 = vmatprep.subr.mxu0 0.0
        %680 = vmatpush1.msra.mxu0 %v391
        %681 = vmatprep.subr.mxu0 0.0
        %682 = vmatpush1.msra.mxu0 %v392
        %683 = vmatprep.subr.mxu0 0.0
        %684 = vmatpush1.msra.mxu0 %v393
        %685 = vmatprep.subr.mxu0 0.0
        %686 = vmatpush1.msra.mxu0 %v394
        %687 = vmatprep.subr.mxu0 0.0
        %688 = vmatpush1.msra.mxu0 %v395
        %689 = vmatprep.subr.mxu0 0.0
        %690 = vmatpush1.msra.mxu0 0.0
        %691 = vmatprep.subr.mxu0 0.0
        %692 = vmatpush1.msra.mxu0 0.0
        %693 = vmatprep.subr.mxu0 0.0
        %694 = vmatpush1.msra.mxu0 0.0
        %695 = vmatprep.subr.mxu0 0.0
        %696 = vmatpush1.msra.mxu0 0.0
        %697 = vmatprep.subr.mxu0 0.0
        %698 = vmatpush1.msra.mxu0 0.0
        %699 = vmatprep.subr.mxu0 0.0
        %700 = vmatpush1.msra.mxu0 0.0
        %701 = vmatprep.subr.mxu0 0.0
        %702 = vmatpush1.msra.mxu0 0.0
        %703 = vmatprep.subr.mxu0 0.0
        %704 = vmatpush1.msra.mxu0 0.0
        %705 = vmatprep.subr.mxu0 0.0
        %706 = vmatpush1.msra.mxu0 0.0
        %707 = vmatprep.subr.mxu0 0.0
        %708 = vmatpush1.msra.mxu0 0.0
        %709 = vmatprep.subr.mxu0 0.0
        %710 = vmatpush1.msra.mxu0 0.0
        %711 = vmatprep.subr.mxu0 0.0
        %712 = vmatpush1.msra.mxu0 0.0
        %713 = vmatprep.subr.mxu0 0.0
        %714 = vmatpush1.msra.mxu0 0.0
        %715 = vmatprep.subr.mxu0 0.0
        %716 = vmatpush1.msra.mxu0 0.0
        %717 = vmatprep.subr.mxu0 0.0
        %718 = vmatpush1.msra.mxu0 0.0
        %719 = vmatprep.subr.mxu0 0.0
        %720 = vmatpush1.msra.mxu0 0.0
        %721 = vmatprep.mubr.f32.mxu0 0.0
        %722 = vmatmul.mubr.f32.gmra.mrb[0].mxu0 %v347
        %v723 = vpop.f32.mrb[0].mxu0
        %v724 = vadd.f32 %v654, %v723
        %v725 = vpop.f32.mrb[0].mxu0
        %726 = vdwg.mxu0
        %v727 = vld [vmem:[%s344] sm:$0x1]
        %v729 = vlaneseq
        %v730 = vshrl.u32 %v729, 7
        %v731 = vsub.s32 0, %v730
        %v732 = vrot.slane %v727, %v731
        %v734 = vadd.f32 %v724, %v732
        %735 = vst [vmem:[%s341] sm:$0xff] %v734
        %s736 = sand.u32 %s173, 1
        %s737 = scalar_lea.sflag [#allocation4], %s736
        %s738 = sand.u32 %s173, 1
        %s739 = smul.addr %s738, 8
        %s740 = scalar_lea.vmem [#allocation9], %s739
        // Predicated region
        $region57: #{fenda_head_forward.1} parent=39 // pred_check
          %p741 = pneg %p183
        $region58: #{fenda_head_forward.1} parent=39 // pred_check_branch
          %743 = sbr.rel (%p741) target = $region60
        $region59: #{fenda_head_forward.1} parent=39 // pred_region
          %s745 = ssub.s32 128, 128
          %746 = vsyncadd %s737, %s745
          %s747 = smul.addr %s25, 2
          %s748 = sadd.s32 %s26, %s747
          %s749 = smul.addr %s748, 128
          %s750 = scalar_lea.hbm %s5, %s749
          %s752 = sshll.u32 %s740, 4
          %s753 = int_to_ptr.vmem [resolvable:$true] %s752
          %755 = dma.vmem_to_hbm [thread:$0]  %s753, 128, %s750, %s737
        $region60: #{fenda_head_forward.1} parent=39 // pred_fallthru
          _
      $region40: #{fenda_head_forward.1} parent=5 // pred_fallthru
        _
      %p756 = scmp.le.s32.totalorder 2, %s16
      // Predicated region
      $region61: #{fenda_head_forward.1} parent=5 // pred_check
        %p757 = pneg %p756
      $region62: #{fenda_head_forward.1} parent=5 // pred_check_branch
        %759 = sbr.rel (%p757) target = $region64
      $region63: #{fenda_head_forward.1} parent=5 // pred_region
        %s760 = ssub.s32 %s16, 2
        // Predicated region
        $region65: #{fenda_head_forward.1} parent=63 // pred_check
          %p761 = pneg %p189
        $region66: #{fenda_head_forward.1} parent=63 // pred_check_branch
          %763 = sbr.rel (%p761) target = $region68
        $region67: #{fenda_head_forward.1} parent=63 // pred_region
          %s764 = sand.u32 %s174, 1
          %s765 = scalar_lea.sflag [#allocation4], %s764
          %s766 = sand.u32 %s174, 1
          %s767 = smul.addr %s766, 8
          %s768 = scalar_lea.vmem [#allocation9], %s767
          %769 = dma.done %s765, 128
        $region68: #{fenda_head_forward.1} parent=63 // pred_fallthru
          _
      $region64: #{fenda_head_forward.1} parent=5 // pred_fallthru
        _
    $region6: #{fenda_head_forward.1} parent=1 // loop_footer
      %s20 = sadd.s32 1, %s16
    $region7: #{fenda_head_forward.1} parent=1 // loop_footer_branch
      %15 = sbr.rel target = $region3
    $region8: #{fenda_head_forward.1} parent=1 // loop_exit
      _
    %770 = vsyncpa [#allocation3], 1
    %s771 = scalar_lea.sflag [#allocation3], 1
    %772 = vsyncpa %s771, 1
    %773 = vsyncpa [#allocation6], 1
    %774 = vsyncpa [#allocation4], 1
    %s775 = scalar_lea.sflag [#allocation4], 1
    %776 = vsyncpa %s775, 1

</llo_original>
